<compile_context>
chip_gen: v7x
topology: tpu7x:2x2x1
jax: 0.10.0
libtpu: 0.0.40
codegen_flags: <defaults>
</compile_context>

<pallas_src>
import functools

import jax
import jax.numpy as jnp
from jax.experimental import pallas as pl
from jax.experimental.pallas import tpu as pltpu

_TARGET_TILE_BYTES = 8 * 1024 * 1024   # ~8 MiB tile -> ~32 MiB with in+out double buffering
_VMEM_LIMIT_BYTES = 48 * 1024 * 1024   # > 32 MiB scoped default, < v7x 64 MiB physical VMEM


def _leaky_hsigmoid_kernel(x_ref, o_ref, *, a_value):
    # Compute in f32 regardless of storage dtype (kernel is HBM-bound, VALU has
    # slack) and use a true division by 6 to match the reference semantics.
    x = x_ref[...].astype(jnp.float32)
    shifted = x + 3.0
    y = jnp.minimum(6.0, jnp.maximum(a_value * shifted, shifted))
    o_ref[...] = (y / 6.0).astype(o_ref.dtype)


def _pick_lane_width(total):
    for lane in (1024, 512, 256, 128):
        if total % lane == 0:
            return lane
    return None


def _run_2d(x2d, a_value):
    rows, lane = x2d.shape
    itemsize = jnp.dtype(x2d.dtype).itemsize
    # dtype-aware block rows: target ~8 MiB per tile (power of two => multiple of 8).
    br = max(_TARGET_TILE_BYTES // (lane * itemsize), 8)
    br = min(br, rows)            # full-extent block when the tensor is small
    grid = (pl.cdiv(rows, br),)   # partial last block -> Pallas masked writeback

    return pl.pallas_call(
        functools.partial(_leaky_hsigmoid_kernel, a_value=float(a_value)),
        out_shape=jax.ShapeDtypeStruct((rows, lane), x2d.dtype),
        grid_spec=pltpu.PrefetchScalarGridSpec(
            num_scalar_prefetch=0,
            grid=grid,
            in_specs=[pl.BlockSpec((br, lane), lambda i: (i, 0))],
            out_specs=pl.BlockSpec((br, lane), lambda i: (i, 0)),
        ),
        # "parallel" lets v7x shard the streaming rows across its 2 TensorCores;
        # harmless no-op on single-TC v5e/v6e.
        # TODO(synk): confirm on a v7x xprof trace that both TCs are busy;
        # switch this axis to pltpu.CORE_PARALLEL if one core idles.
        compiler_params=pltpu.CompilerParams(
            dimension_semantics=("parallel",),
            vmem_limit_bytes=_VMEM_LIMIT_BYTES,
        ),
    )(x2d)


@functools.partial(jax.jit, static_argnames=("a_value",))
def leaky_hsigmoid(x, a_value=0.001):
    """out = min(6, max(a*(x+3), x+3)) / 6, elementwise. x: any shape (NCHW ref)."""
    orig_shape = x.shape
    total = 1
    for d in orig_shape:
        total *= d

    lane = _pick_lane_width(total)
    if lane is not None:
        # Hot path: zero-copy bitcast reshape to a lane-dense 2-D view.
        out2d = _run_2d(x.reshape(total // lane, lane), a_value)
        return out2d.reshape(orig_shape)

    # Rare ragged path (total not a multiple of 128): pad to one lane-dense
    # block, run, slice back.  Such tensors are tiny/latency-bound in practice.
    lane = 1024
    padded_total = pl.cdiv(total, lane) * lane
    flat = jnp.pad(x.reshape(total), (0, padded_total - total))
    out2d = _run_2d(flat.reshape(padded_total // lane, lane), a_value)
    return out2d.reshape(padded_total)[:total].reshape(orig_shape)


def _reference(x, a_value=0.001):
    shifted = x + 3.0
    return jnp.minimum(6.0, jnp.maximum(a_value * shifted, shifted)) / 6.0


if __name__ == "__main__":
    key = jax.random.PRNGKey(0)

    # Small NCHW input consistent with a conv-activation module (aligned path).
    x = jax.random.normal(key, (2, 4, 16, 16), dtype=jnp.float32) * 5.0
    out = jax.block_until_ready(leaky_hsigmoid(x, a_value=0.001))
    ref = _reference(x, a_value=0.001)
    assert out.shape == x.shape and out.dtype == x.dtype
    assert jnp.allclose(out, ref, atol=1e-6, rtol=1e-6), "mismatch vs reference"

    # Ragged shape exercising the fallback path.
    x2 = jax.random.normal(jax.random.PRNGKey(0), (3, 5, 7, 9), dtype=jnp.float32) * 5.0
    out2 = jax.block_until_ready(leaky_hsigmoid(x2, a_value=0.001))
    ref2 = _reference(x2, a_value=0.001)
    assert out2.shape == x2.shape and out2.dtype == x2.dtype
    assert jnp.allclose(out2, ref2, atol=1e-6, rtol=1e-6), "mismatch (ragged)"

    # bf16 storage with f32 internal compute.
    x3 = jax.random.normal(jax.random.PRNGKey(1), (2, 4, 16, 16), dtype=jnp.bfloat16) * 5.0
    out3 = jax.block_until_ready(leaky_hsigmoid(x3, a_value=0.001))
    ref3 = _reference(x3.astype(jnp.float32), a_value=0.001).astype(jnp.bfloat16)
    assert out3.dtype == jnp.bfloat16
    assert jnp.allclose(out3.astype(jnp.float32), ref3.astype(jnp.float32),
                        atol=2e-2, rtol=2e-2), "mismatch (bf16)"

    print("KERNEL_OK")
</pallas_src>

<mosaic_0001>
module attributes {stable_mosaic.version = 11 : i64} {
  func.func @_leaky_hsigmoid_kernel(%arg0: i32, %arg1: memref<2x1024xf32, #tpu.memory_space<vmem>>, %arg2: memref<2x1024xf32, #tpu.memory_space<vmem>>) attributes {dimension_semantics = [#tpu.dimension_semantics<parallel>], iteration_bounds = array<i64: 1>, scalar_prefetch = 0 : i64, scratch_operands = 0 : i64, tpu.core_type = #tpu.core_type<tc>, window_params = [{transform_indices = @transform_0, window_bounds = array<i64: 2, 1024>}, {transform_indices = @transform_1, window_bounds = array<i64: 2, 1024>}]} {
    %c0 = arith.constant 0 : index
    %c0_0 = arith.constant 0 : index
    %0 = vector.load %arg1[%c0, %c0_0] : memref<2x1024xf32, #tpu.memory_space<vmem>>, vector<2x1024xf32>
    %cst = arith.constant 3.000000e+00 : f32
    %1 = vector.broadcast %cst : f32 to vector<2x1024xf32>
    %2 = arith.addf %0, %1 : vector<2x1024xf32>
    %cst_1 = arith.constant 1.000000e-03 : f32
    %3 = vector.broadcast %cst_1 : f32 to vector<2x1024xf32>
    %4 = arith.mulf %3, %2 : vector<2x1024xf32>
    %5 = arith.maximumf %4, %2 : vector<2x1024xf32>
    %cst_2 = arith.constant 6.000000e+00 : f32
    %6 = vector.broadcast %cst_2 : f32 to vector<2x1024xf32>
    %7 = arith.minimumf %6, %5 : vector<2x1024xf32>
    %cst_3 = arith.constant 6.000000e+00 : f32
    %8 = vector.broadcast %cst_3 : f32 to vector<2x1024xf32>
    %9 = arith.divf %7, %8 : vector<2x1024xf32>
    %c0_4 = arith.constant 0 : index
    %c0_5 = arith.constant 0 : index
    %10 = vector.load %arg2[%c0_4, %c0_5] : memref<2x1024xf32, #tpu.memory_space<vmem>>, vector<2x1024xf32>
    tpu.vector_store %arg2[%c0_4, %c0_5], %9 {strides = array<i32>} : memref<2x1024xf32, #tpu.memory_space<vmem>>, vector<2x1024xf32>,
    return
  }
  func.func @transform_0(%arg0: i32) -> (i32, i32) {
    %c0_i32 = arith.constant 0 : i32
    %c0_i32_0 = arith.constant 0 : i32
    return %arg0, %c0_i32 : i32, i32
  }
  func.func @transform_1(%arg0: i32) -> (i32, i32) {
    %c0_i32 = arith.constant 0 : i32
    %c0_i32_0 = arith.constant 0 : i32
    return %arg0, %c0_i32 : i32, i32
  }
}

</mosaic_0001>

<llo_original>
// kernel: leaky_hsigmoid.1
$region0: #{leaky_hsigmoid.1}
  #allocation0 [shape = 'u32[]', space=smem, size = 0x4, offset = 0x4, fixed_abs, tag = 'smem constant byte address 0x4 - core index']
  #allocation1 [shape = 'u32[144,128]{1,0:T(1,128)}', space=vmem, size = 0x12000, scoped, tag = 'internal scratch']
  %s0 = inlined_call_operand.vmem [shape: f32[2,1024], index: 0, kind: input, shape index: {}]
  %s1 = inlined_call_operand.vmem [shape: f32[2,1024], index: 1, kind: output, shape index: {}]
  %s2 = sld [smem:[#allocation0]]
  $region14: #{leaky_hsigmoid.1} parent=0
    _
  %s4 = ssub.s32 1, %s2
  %s5 = scalar_select 0, %s4, %s2
  // Predicated region
  $region2: #{leaky_hsigmoid.1} parent=0 // pred_check
    _
  $region3: #{leaky_hsigmoid.1} parent=0 // pred_check_branch
    %7 = sbr.rel (0) target = $region5
  $region4: #{leaky_hsigmoid.1} parent=0 // pred_region
    _
  $region5: #{leaky_hsigmoid.1} parent=0 // pred_fallthru
    _
  %v8 = vld [vmem:[%s0] sm:$0xff]
  %v9 = vld [vmem:[%s0 + $0x8] sm:$0xff]
  %v10 = vadd.f32 %v8, 3.0
  %v11 = vadd.f32 %v9, 3.0
  %v12 = vmul.f32 %v10, 0.001
  %v13 = vmul.f32 %v11, 0.001
  %v14 = vmax.f32 %v12, %v10
  %v15 = vmax.f32 %v13, %v11
  %v16 = vmin.f32 %v14, 6.0
  %v17 = vmin.f32 %v15, 6.0
  %v18 = vrcp.pop 6.0
  %v19 = vmul.f32 %v16, %v18
  %v20 = vmul.f32 %v17, %v18
  %21 = vst [vmem:[%s1] sm:$0xff] %v19
  %22 = vst [vmem:[%s1 + $0x8] sm:$0xff] %v20
  // Predicated region
  $region6: #{leaky_hsigmoid.1} parent=0 // pred_check
    _
  $region7: #{leaky_hsigmoid.1} parent=0 // pred_check_branch
    %24 = sbr.rel (0) target = $region9
  $region8: #{leaky_hsigmoid.1} parent=0 // pred_region
    _
  $region9: #{leaky_hsigmoid.1} parent=0 // pred_fallthru
    _
  // Predicated region
  $region10: #{leaky_hsigmoid.1} parent=0 // pred_check
    _
  $region11: #{leaky_hsigmoid.1} parent=0 // pred_check_branch
    %26 = sbr.rel (0) target = $region13
  $region12: #{leaky_hsigmoid.1} parent=0 // pred_region
    _
  $region13: #{leaky_hsigmoid.1} parent=0 // pred_fallthru
    _

</llo_original>
